<compile_context>
chip_gen: v7x
topology: tpu7x:2x2x1
jax: 0.10.0
libtpu: 0.0.40
codegen_flags: <defaults>
</compile_context>

<pallas_src>
import math

import jax
import jax.numpy as jnp
from jax.experimental import pallas as pl
from jax.experimental.pallas import tpu as pltpu

IN_DIM = 310
H1, H2, OUT = 256, 128, 64
OUT_PAD = 128           # lane-dense output slab; real columns are [:, :64]
NEG_SLOPE = 0.01


def _round_up(n, m):
    return ((n + m - 1) // m) * m


def _leaky_relu(z):
    # slope in (0, 1)  =>  max(z, slope*z) == leaky_relu(z); one VALU op.
    return jnp.maximum(z, NEG_SLOPE * z)


def _batch_axis_config():
    """(dimension_semantics, is_multicore).  CORE_PARALLEL only on v7x-class
    chips (2 TensorCores); plain "parallel" elsewhere (known-good on v5e/v6e)."""
    try:
        kind = jax.devices()[0].device_kind.lower()
    except Exception:  # pragma: no cover - defensive; keep kernel usable
        kind = ""
    if "v7" in kind and hasattr(pltpu, "CORE_PARALLEL"):
        return (pltpu.CORE_PARALLEL,), True
    return ("parallel",), False


def cfe_kernel(x_ref, w1_ref, b1_ref, w2_ref, b2_ref, w3_ref, b3_ref, o_ref):
    # Cast the raw f32 activation tile to the compute dtype in-kernel (no-op
    # for the f32 path, bf16 for the fast path).
    x = x_ref[...].astype(w1_ref.dtype)
    # Layer 1: (tb, 310) @ (310, 256) + (1, 256), f32 accumulation on the MXU.
    z1 = jnp.dot(x, w1_ref[...], preferred_element_type=jnp.float32)
    a1 = _leaky_relu(z1 + b1_ref[...])
    # Layer 2: (tb, 256) @ (256, 128) + (1, 128)
    z2 = jnp.dot(a1.astype(w2_ref.dtype), w2_ref[...],
                 preferred_element_type=jnp.float32)
    a2 = _leaky_relu(z2 + b2_ref[...])
    # Layer 3: (tb, 128) @ (128, 128-padded) + (1, 128-padded); padded columns
    # are exactly zero (zero weights, zero bias, leaky(0) == 0).
    z3 = jnp.dot(a2.astype(w3_ref.dtype), w3_ref[...],
                 preferred_element_type=jnp.float32)
    a3 = _leaky_relu(z3 + b3_ref[...])
    o_ref[...] = a3.astype(o_ref.dtype)


def prepare_params(params, compute_dtype=jnp.bfloat16):
    """One-time parameter preparation (hoisted out of the per-call path):
    cast weights to the compute dtype and pad layer 3 to a lane-dense 128-wide
    output.  Biases stay f32 for the f32 epilogue."""
    w3p = jnp.pad(params["w3"], ((0, 0), (0, OUT_PAD - OUT)))
    b3p = jnp.pad(params["b3"], ((0, 0), (0, OUT_PAD - OUT)))
    return (
        params["w1"].astype(compute_dtype), params["b1"].astype(jnp.float32),
        params["w2"].astype(compute_dtype), params["b2"].astype(jnp.float32),
        w3p.astype(compute_dtype),          b3p.astype(jnp.float32),
    )


def cfe_forward(x, prepared, *, tile_b=1024):
    """x: (B, 310) float32.  prepared: output of prepare_params()."""
    w1, b1, w2, b2, w3p, b3p = prepared
    B, K = x.shape
    assert K == IN_DIM, K

    semantics, multicore = _batch_axis_config()

    # Batch tile: capped at tile_b, always a multiple of 8 sublanes.
    tb = _round_up(min(tile_b, B), 8)
    # On v7x make sure the grid has >= 2 steps so CORE_PARALLEL can shard the
    # batch axis across both TensorCores.
    if multicore and B >= 16 and pl.cdiv(B, tb) < 2:
        tb = _round_up(pl.cdiv(B, 2), 8)

    b_pad = tb * pl.cdiv(B, tb)
    x_p = x if b_pad == B else jnp.pad(x, ((0, b_pad - B), (0, 0)))

    grid = (b_pad // tb,)
    resident = lambda shape: pl.BlockSpec(shape, lambda i: (0, 0))  # VMEM-resident

    out = pl.pallas_call(
        cfe_kernel,
        out_shape=jax.ShapeDtypeStruct((b_pad, OUT_PAD), jnp.float32),
        grid=grid,
        in_specs=[
            pl.BlockSpec((tb, IN_DIM), lambda i: (i, 0)),   # x tile (pipelined)
            resident((IN_DIM, H1)),   resident((1, H1)),    # layer 1
            resident((H1, H2)),       resident((1, H2)),    # layer 2
            resident((H2, OUT_PAD)),  resident((1, OUT_PAD)),  # layer 3 (padded)
        ],
        out_specs=pl.BlockSpec((tb, OUT_PAD), lambda i: (i, 0)),
        compiler_params=pltpu.CompilerParams(
            dimension_semantics=semantics,
            vmem_limit_bytes=32 * 1024 * 1024,
        ),
    )(x_p, w1, b1, w2, b2, w3p, b3p)

    return out[:B, :OUT]


def init_params(key):
    """Deterministic init matching torch.nn.Linear defaults:
    weight, bias ~ U(-1/sqrt(fan_in), 1/sqrt(fan_in))."""
    dims = [(IN_DIM, H1), (H1, H2), (H2, OUT)]
    params = {}
    for i, (fan_in, fan_out) in enumerate(dims, start=1):
        key, kw, kb = jax.random.split(key, 3)
        bound = 1.0 / math.sqrt(fan_in)
        params[f"w{i}"] = jax.random.uniform(
            kw, (fan_in, fan_out), jnp.float32, -bound, bound)
        params[f"b{i}"] = jax.random.uniform(
            kb, (1, fan_out), jnp.float32, -bound, bound)
    return params


def reference_forward(x, params):
    h = x
    for i in (1, 2, 3):
        h = h @ params[f"w{i}"] + params[f"b{i}"]
        h = jnp.where(h > 0, h, NEG_SLOPE * h)
    return h


if __name__ == "__main__":
    key = jax.random.PRNGKey(0)
    kx, kp = jax.random.split(key)

    batch = 8  # small demo batch; serving/training should batch many rows per call
    x = jax.random.normal(kx, (batch, IN_DIM), jnp.float32)
    params = init_params(kp)
    ref = reference_forward(x, params)

    # Exact (f32) path — tight tolerance vs. the pure-JAX reference.
    prep_f32 = prepare_params(params, compute_dtype=jnp.float32)
    out_f32 = jax.block_until_ready(cfe_forward(x, prep_f32))
    assert out_f32.shape == (batch, OUT), out_f32.shape
    assert jnp.allclose(out_f32, ref, atol=1e-4, rtol=1e-4), (
        float(jnp.max(jnp.abs(out_f32 - ref))))

    # Fast (bf16 matmul, f32 accumulation) path — loose tolerance.
    prep_bf16 = prepare_params(params, compute_dtype=jnp.bfloat16)
    out_bf16 = jax.block_until_ready(cfe_forward(x, prep_bf16))
    assert out_bf16.shape == (batch, OUT), out_bf16.shape
    assert jnp.allclose(out_bf16, ref, atol=5e-2, rtol=5e-2), (
        float(jnp.max(jnp.abs(out_bf16 - ref))))

    print("KERNEL_OK")
</pallas_src>

<mosaic_0001>
module attributes {stable_mosaic.version = 11 : i64} {
  func.func @cfe_kernel(%arg0: i32, %arg1: memref<8x310xf32, #tpu.memory_space<vmem>>, %arg2: memref<310x256xf32, #tpu.memory_space<vmem>>, %arg3: memref<1x256xf32, #tpu.memory_space<vmem>>, %arg4: memref<256x128xf32, #tpu.memory_space<vmem>>, %arg5: memref<1x128xf32, #tpu.memory_space<vmem>>, %arg6: memref<128x128xf32, #tpu.memory_space<vmem>>, %arg7: memref<1x128xf32, #tpu.memory_space<vmem>>, %arg8: memref<8x128xf32, #tpu.memory_space<vmem>>) attributes {dimension_semantics = [#tpu.dimension_semantics<parallel>], iteration_bounds = array<i64: 1>, scalar_prefetch = 0 : i64, scratch_operands = 0 : i64, tpu.core_type = #tpu.core_type<tc>, window_params = [{transform_indices = @transform_0, window_bounds = array<i64: 8, 310>}, {pipeline_mode = #tpu.pipeline_mode<synchronous>, transform_indices = @transform_1, window_bounds = array<i64: 310, 256>}, {pipeline_mode = #tpu.pipeline_mode<synchronous>, transform_indices = @transform_2, window_bounds = array<i64: 1, 256>}, {pipeline_mode = #tpu.pipeline_mode<synchronous>, transform_indices = @transform_3, window_bounds = array<i64: 256, 128>}, {pipeline_mode = #tpu.pipeline_mode<synchronous>, transform_indices = @transform_4, window_bounds = array<i64: 1, 128>}, {pipeline_mode = #tpu.pipeline_mode<synchronous>, transform_indices = @transform_5, window_bounds = array<i64: 128, 128>}, {pipeline_mode = #tpu.pipeline_mode<synchronous>, transform_indices = @transform_6, window_bounds = array<i64: 1, 128>}, {transform_indices = @transform_7, window_bounds = array<i64: 8, 128>}]} {
    %c0 = arith.constant 0 : index
    %c0_0 = arith.constant 0 : index
    %0 = vector.load %arg1[%c0, %c0_0] : memref<8x310xf32, #tpu.memory_space<vmem>>, vector<8x310xf32>
    %c0_1 = arith.constant 0 : index
    %c0_2 = arith.constant 0 : index
    %1 = vector.load %arg2[%c0_1, %c0_2] : memref<310x256xf32, #tpu.memory_space<vmem>>, vector<310x256xf32>
    %cst = arith.constant dense<0.000000e+00> : vector<8x256xf32>
    %2 = tpu.matmul %0, %1, %cst {dimension_numbers = #tpu.dot_dimension_numbers<[1], [0], [0], [1], [0, 0, 1, 1], [], []>} : vector<8x310xf32>, vector<310x256xf32>, vector<8x256xf32> -> vector<8x256xf32>
    %c0_3 = arith.constant 0 : index
    %c0_4 = arith.constant 0 : index
    %3 = vector.load %arg3[%c0_3, %c0_4] : memref<1x256xf32, #tpu.memory_space<vmem>>, vector<1x256xf32>
    %4 = vector.broadcast %3 : vector<1x256xf32> to vector<8x256xf32>
    %5 = arith.addf %2, %4 : vector<8x256xf32>
    %cst_5 = arith.constant 0.00999999977 : f32
    %6 = vector.broadcast %cst_5 : f32 to vector<8x256xf32>
    %7 = arith.mulf %6, %5 : vector<8x256xf32>
    %8 = arith.maximumf %5, %7 : vector<8x256xf32>
    %c0_6 = arith.constant 0 : index
    %c0_7 = arith.constant 0 : index
    %9 = vector.load %arg4[%c0_6, %c0_7] : memref<256x128xf32, #tpu.memory_space<vmem>>, vector<256x128xf32>
    %cst_8 = arith.constant dense<0.000000e+00> : vector<8x128xf32>
    %10 = tpu.matmul %8, %9, %cst_8 {dimension_numbers = #tpu.dot_dimension_numbers<[1], [0], [0], [1], [0, 0, 1, 1], [], []>} : vector<8x256xf32>, vector<256x128xf32>, vector<8x128xf32> -> vector<8x128xf32>
    %c0_9 = arith.constant 0 : index
    %c0_10 = arith.constant 0 : index
    %11 = vector.load %arg5[%c0_9, %c0_10] : memref<1x128xf32, #tpu.memory_space<vmem>>, vector<1x128xf32>
    %12 = vector.broadcast %11 : vector<1x128xf32> to vector<8x128xf32>
    %13 = arith.addf %10, %12 : vector<8x128xf32>
    %cst_11 = arith.constant 0.00999999977 : f32
    %14 = vector.broadcast %cst_11 : f32 to vector<8x128xf32>
    %15 = arith.mulf %14, %13 : vector<8x128xf32>
    %16 = arith.maximumf %13, %15 : vector<8x128xf32>
    %c0_12 = arith.constant 0 : index
    %c0_13 = arith.constant 0 : index
    %17 = vector.load %arg6[%c0_12, %c0_13] : memref<128x128xf32, #tpu.memory_space<vmem>>, vector<128x128xf32>
    %cst_14 = arith.constant dense<0.000000e+00> : vector<8x128xf32>
    %18 = tpu.matmul %16, %17, %cst_14 {dimension_numbers = #tpu.dot_dimension_numbers<[1], [0], [0], [1], [0, 0, 1, 1], [], []>} : vector<8x128xf32>, vector<128x128xf32>, vector<8x128xf32> -> vector<8x128xf32>
    %c0_15 = arith.constant 0 : index
    %c0_16 = arith.constant 0 : index
    %19 = vector.load %arg7[%c0_15, %c0_16] : memref<1x128xf32, #tpu.memory_space<vmem>>, vector<1x128xf32>
    %20 = vector.broadcast %19 : vector<1x128xf32> to vector<8x128xf32>
    %21 = arith.addf %18, %20 : vector<8x128xf32>
    %cst_17 = arith.constant 0.00999999977 : f32
    %22 = vector.broadcast %cst_17 : f32 to vector<8x128xf32>
    %23 = arith.mulf %22, %21 : vector<8x128xf32>
    %24 = arith.maximumf %21, %23 : vector<8x128xf32>
    %c0_18 = arith.constant 0 : index
    %c0_19 = arith.constant 0 : index
    %25 = vector.load %arg8[%c0_18, %c0_19] : memref<8x128xf32, #tpu.memory_space<vmem>>, vector<8x128xf32>
    tpu.vector_store %arg8[%c0_18, %c0_19], %24 {strides = array<i32>} : memref<8x128xf32, #tpu.memory_space<vmem>>, vector<8x128xf32>,
    return
  }
  func.func @transform_0(%arg0: i32) -> (i32, i32) {
    %c0_i32 = arith.constant 0 : i32
    %c0_i32_0 = arith.constant 0 : i32
    return %arg0, %c0_i32 : i32, i32
  }
  func.func @transform_1(%arg0: i32) -> (i32, i32) {
    %c0_i32 = arith.constant 0 : i32
    %c0_i32_0 = arith.constant 0 : i32
    %c0_i32_1 = arith.constant 0 : i32
    return %c0_i32, %c0_i32_0 : i32, i32
  }
  func.func @transform_2(%arg0: i32) -> (i32, i32) {
    %c0_i32 = arith.constant 0 : i32
    %c0_i32_0 = arith.constant 0 : i32
    %c0_i32_1 = arith.constant 0 : i32
    return %c0_i32, %c0_i32_0 : i32, i32
  }
  func.func @transform_3(%arg0: i32) -> (i32, i32) {
    %c0_i32 = arith.constant 0 : i32
    %c0_i32_0 = arith.constant 0 : i32
    %c0_i32_1 = arith.constant 0 : i32
    return %c0_i32, %c0_i32_0 : i32, i32
  }
  func.func @transform_4(%arg0: i32) -> (i32, i32) {
    %c0_i32 = arith.constant 0 : i32
    %c0_i32_0 = arith.constant 0 : i32
    %c0_i32_1 = arith.constant 0 : i32
    return %c0_i32, %c0_i32_0 : i32, i32
  }
  func.func @transform_5(%arg0: i32) -> (i32, i32) {
    %c0_i32 = arith.constant 0 : i32
    %c0_i32_0 = arith.constant 0 : i32
    %c0_i32_1 = arith.constant 0 : i32
    return %c0_i32, %c0_i32_0 : i32, i32
  }
  func.func @transform_6(%arg0: i32) -> (i32, i32) {
    %c0_i32 = arith.constant 0 : i32
    %c0_i32_0 = arith.constant 0 : i32
    %c0_i32_1 = arith.constant 0 : i32
    return %c0_i32, %c0_i32_0 : i32, i32
  }
  func.func @transform_7(%arg0: i32) -> (i32, i32) {
    %c0_i32 = arith.constant 0 : i32
    %c0_i32_0 = arith.constant 0 : i32
    return %arg0, %c0_i32 : i32, i32
  }
}

</mosaic_0001>

<llo_original>
// kernel: tpu_custom_call.1
$region0: #{tpu_custom_call.1}
  #allocation0 [shape = 'u32[]', space=smem, size = 0x4, offset = 0x4, fixed_abs, tag = 'smem constant byte address 0x4 - core index']
  #allocation1 [shape = 'u32[144,128]{1,0:T(1,128)}', space=vmem, size = 0x12000, scoped, tag = 'internal scratch']
  %s0 = inlined_call_operand.hbm [shape: f32[8,310], index: 0, kind: input, shape index: {}]
  %s1 = inlined_call_operand.hbm [shape: f32[310,256], index: 1, kind: input, shape index: {}]
  %s2 = inlined_call_operand.vmem [shape: f32[1,256], index: 2, kind: input, shape index: {}]
  %s3 = inlined_call_operand.hbm [shape: f32[256,128], index: 3, kind: input, shape index: {}]
  %s4 = inlined_call_operand.vmem [shape: f32[1,128], index: 4, kind: input, shape index: {}]
  %s5 = inlined_call_operand.hbm [shape: f32[128,128], index: 5, kind: input, shape index: {}]
  %s6 = inlined_call_operand.vmem [shape: f32[1,128], index: 6, kind: input, shape index: {}]
  %s7 = inlined_call_operand.hbm [shape: f32[8,128], index: 7, kind: output, shape index: {}]
  %s8 = sld [smem:[#allocation0]]
  $region54: #{tpu_custom_call.1} parent=0
    _
  %s10 = ssub.s32 1, %s8
  %s11 = scalar_select 0, %s10, %s8
  $region1: #{tpu_custom_call.1} parent=0
    #allocation2 [shape = 'u8[12288]{0}', space=vmem, size = 0x3000, scoped, tag = 'input window, operand 0, single buffered']
    #allocation3 [shape = 's32[1]{0}', space=sflag, size = 0x4, scoped, tag = 'scoped memory for tpu_custom_call.1']
    #allocation4 [shape = 's32[1]{0}', space=sflag, size = 0x4, scoped, tag = 'scoped memory for tpu_custom_call.1']
    #allocation5 [shape = 'u8[319488]{0}', space=vmem, size = 0x4e000, scoped, tag = 'input window, operand 1, single buffered']
    #allocation6 [shape = 's32[1]{0}', space=sflag, size = 0x4, scoped, tag = 'scoped memory for tpu_custom_call.1']
    #allocation7 [shape = 'u8[131072]{0}', space=vmem, size = 0x20000, scoped, tag = 'input window, operand 3, single buffered']
    #allocation8 [shape = 'u8[65536]{0}', space=vmem, size = 0x10000, scoped, tag = 'input window, operand 5, single buffered']
    #allocation9 [shape = 's32[1]{0}', space=sflag, size = 0x4, scoped, tag = 'scoped memory for tpu_custom_call.1']
    #allocation10 [shape = 'u8[4096]{0}', space=vmem, size = 0x1000, scoped, tag = 'output window, operand 0, single buffered']
    %12 = vsyncpa [#allocation3], 0
    %13 = vsyncpa [#allocation6], 0
    %14 = vsyncpa [#allocation9], 0
    %15 = vsyncpa [#allocation4], 0
    // Predicated region
    $region2: #{tpu_custom_call.1} parent=1 // pred_check
      _
    $region3: #{tpu_custom_call.1} parent=1 // pred_check_branch
      %17 = sbr.rel (0) target = $region5
    $region4: #{tpu_custom_call.1} parent=1 // pred_region
      %s19 = ssub.s32 384, 384
      %20 = vsyncadd [#allocation3], %s19
      %s22 = sshll.u32 [#allocation2], 4
      %s23 = int_to_ptr.vmem [resolvable:$true] %s22
      %25 = dma.hbm_to_vmem [thread:$0]  %s0, 384, %s23, [#allocation3]
    $region5: #{tpu_custom_call.1} parent=1 // pred_fallthru
      _
    // Predicated region
    $region6: #{tpu_custom_call.1} parent=1 // pred_check
      _
    $region7: #{tpu_custom_call.1} parent=1 // pred_check_branch
      %27 = sbr.rel (0) target = $region9
    $region8: #{tpu_custom_call.1} parent=1 // pred_region
      %s29 = ssub.s32 9984, 9984
      %30 = vsyncadd [#allocation6], %s29
      %s31 = sshll.u32 [#allocation5], 4
      %s32 = int_to_ptr.vmem [resolvable:$true] %s31
      %37 = dma.hbm_to_vmem [thread:$0]  %s1, 9984, %s32, [#allocation6], 256, 256, 16
    $region9: #{tpu_custom_call.1} parent=1 // pred_fallthru
      _
    // Predicated region
    $region10: #{tpu_custom_call.1} parent=1 // pred_check
      _
    $region11: #{tpu_custom_call.1} parent=1 // pred_check_branch
      %39 = sbr.rel (0) target = $region13
    $region12: #{tpu_custom_call.1} parent=1 // pred_region
      _
    $region13: #{tpu_custom_call.1} parent=1 // pred_fallthru
      _
    // Predicated region
    $region14: #{tpu_custom_call.1} parent=1 // pred_check
      _
    $region15: #{tpu_custom_call.1} parent=1 // pred_check_branch
      %41 = sbr.rel (0) target = $region17
    $region16: #{tpu_custom_call.1} parent=1 // pred_region
      %s43 = ssub.s32 4096, 4096
      %44 = vsyncadd [#allocation6], %s43
      %s45 = sshll.u32 [#allocation7], 4
      %s46 = int_to_ptr.vmem [resolvable:$true] %s45
      %51 = dma.hbm_to_vmem [thread:$0]  %s3, 4096, %s46, [#allocation6], 128, 128, 8
    $region17: #{tpu_custom_call.1} parent=1 // pred_fallthru
      _
    // Predicated region
    $region18: #{tpu_custom_call.1} parent=1 // pred_check
      _
    $region19: #{tpu_custom_call.1} parent=1 // pred_check_branch
      %53 = sbr.rel (0) target = $region21
    $region20: #{tpu_custom_call.1} parent=1 // pred_region
      _
    $region21: #{tpu_custom_call.1} parent=1 // pred_fallthru
      _
    // Predicated region
    $region22: #{tpu_custom_call.1} parent=1 // pred_check
      _
    $region23: #{tpu_custom_call.1} parent=1 // pred_check_branch
      %55 = sbr.rel (0) target = $region25
    $region24: #{tpu_custom_call.1} parent=1 // pred_region
      %s57 = ssub.s32 2048, 2048
      %58 = vsyncadd [#allocation9], %s57
      %s59 = sshll.u32 [#allocation8], 4
      %s60 = int_to_ptr.vmem [resolvable:$true] %s59
      %65 = dma.hbm_to_vmem [thread:$0]  %s5, 2048, %s60, [#allocation9], 128, 128, 8
    $region25: #{tpu_custom_call.1} parent=1 // pred_fallthru
      _
    // Predicated region
    $region26: #{tpu_custom_call.1} parent=1 // pred_check
      _
    $region27: #{tpu_custom_call.1} parent=1 // pred_check_branch
      %67 = sbr.rel (0) target = $region29
    $region28: #{tpu_custom_call.1} parent=1 // pred_region
      _
    $region29: #{tpu_custom_call.1} parent=1 // pred_fallthru
      _
    // Predicated region
    $region30: #{tpu_custom_call.1} parent=1 // pred_check
      _
    $region31: #{tpu_custom_call.1} parent=1 // pred_check_branch
      %69 = sbr.rel (0) target = $region33
    $region32: #{tpu_custom_call.1} parent=1 // pred_region
      %70 = dma.done [#allocation3], 384
    $region33: #{tpu_custom_call.1} parent=1 // pred_fallthru
      _
    // Predicated region
    $region34: #{tpu_custom_call.1} parent=1 // pred_check
      _
    $region35: #{tpu_custom_call.1} parent=1 // pred_check_branch
      %72 = sbr.rel (0) target = $region37
    $region36: #{tpu_custom_call.1} parent=1 // pred_region
      %73 = dma.done [#allocation6], 9984
    $region37: #{tpu_custom_call.1} parent=1 // pred_fallthru
      _
    // Predicated region
    $region38: #{tpu_custom_call.1} parent=1 // pred_check
      _
    $region39: #{tpu_custom_call.1} parent=1 // pred_check_branch
      %75 = sbr.rel (0) target = $region41
    $region40: #{tpu_custom_call.1} parent=1 // pred_region
      %76 = dma.done [#allocation6], 4096
    $region41: #{tpu_custom_call.1} parent=1 // pred_fallthru
      _
    // Predicated region
    $region42: #{tpu_custom_call.1} parent=1 // pred_check
      _
    $region43: #{tpu_custom_call.1} parent=1 // pred_check_branch
      %78 = sbr.rel (0) target = $region45
    $region44: #{tpu_custom_call.1} parent=1 // pred_region
      %79 = dma.done [#allocation9], 2048
    $region45: #{tpu_custom_call.1} parent=1 // pred_fallthru
      _
    %v80 = vld [vmem:[#allocation2] sm:$0xff]
    %v81 = vld [vmem:[#allocation2 + $0x8] sm:$0xff]
    %v82 = vld [vmem:[#allocation2 + $0x10] sm:$0xff]
    %v83 = vld [vmem:[#allocation5] sm:$0xff]
    %v84 = vld [vmem:[#allocation5 + $0x8] sm:$0xff]
    %v85 = vld [vmem:[#allocation5 + $0x10] sm:$0xff]
    %v86 = vld [vmem:[#allocation5 + $0x18] sm:$0xff]
    %v87 = vld [vmem:[#allocation5 + $0x20] sm:$0xff]
    %v88 = vld [vmem:[#allocation5 + $0x28] sm:$0xff]
    %v89 = vld [vmem:[#allocation5 + $0x30] sm:$0xff]
    %v90 = vld [vmem:[#allocation5 + $0x38] sm:$0xff]
    %v91 = vld [vmem:[#allocation5 + $0x40] sm:$0xff]
    %v92 = vld [vmem:[#allocation5 + $0x48] sm:$0xff]
    %v93 = vld [vmem:[#allocation5 + $0x50] sm:$0xff]
    %v94 = vld [vmem:[#allocation5 + $0x58] sm:$0xff]
    %v95 = vld [vmem:[#allocation5 + $0x60] sm:$0xff]
    %v96 = vld [vmem:[#allocation5 + $0x68] sm:$0xff]
    %v97 = vld [vmem:[#allocation5 + $0x70] sm:$0xff]
    %v98 = vld [vmem:[#allocation5 + $0x78] sm:$0xff]
    %v99 = vld [vmem:[#allocation5 + $0x80] sm:$0xff]
    %v100 = vld [vmem:[#allocation5 + $0x88] sm:$0xff]
    %v101 = vld [vmem:[#allocation5 + $0x90] sm:$0xff]
    %v102 = vld [vmem:[#allocation5 + $0x98] sm:$0xff]
    %v103 = vld [vmem:[#allocation5 + $0xa0] sm:$0xff]
    %v104 = vld [vmem:[#allocation5 + $0xa8] sm:$0xff]
    %v105 = vld [vmem:[#allocation5 + $0xb0] sm:$0xff]
    %v106 = vld [vmem:[#allocation5 + $0xb8] sm:$0xff]
    %v107 = vld [vmem:[#allocation5 + $0xc0] sm:$0xff]
    %v108 = vld [vmem:[#allocation5 + $0xc8] sm:$0xff]
    %v109 = vld [vmem:[#allocation5 + $0xd0] sm:$0xff]
    %v110 = vld [vmem:[#allocation5 + $0xd8] sm:$0xff]
    %v111 = vld [vmem:[#allocation5 + $0xe0] sm:$0xff]
    %v112 = vld [vmem:[#allocation5 + $0xe8] sm:$0xff]
    %v113 = vld [vmem:[#allocation5 + $0xf0] sm:$0xff]
    %v114 = vld [vmem:[#allocation5 + $0xf8] sm:$0xff]
    %v115 = vld [vmem:[#allocation5 + $0x100] sm:$0xff]
    %v116 = vld [vmem:[#allocation5 + $0x108] sm:$0xff]
    %v117 = vld [vmem:[#allocation5 + $0x110] sm:$0xff]
    %v118 = vld [vmem:[#allocation5 + $0x118] sm:$0xff]
    %v119 = vld [vmem:[#allocation5 + $0x120] sm:$0xff]
    %v120 = vld [vmem:[#allocation5 + $0x128] sm:$0xff]
    %v121 = vld [vmem:[#allocation5 + $0x130] sm:$0xff]
    %v122 = vld [vmem:[#allocation5 + $0x138] sm:$0xff]
    %v123 = vld [vmem:[#allocation5 + $0x140] sm:$0xff]
    %v124 = vld [vmem:[#allocation5 + $0x148] sm:$0xff]
    %v125 = vld [vmem:[#allocation5 + $0x150] sm:$0xff]
    %v126 = vld [vmem:[#allocation5 + $0x158] sm:$0xff]
    %v127 = vld [vmem:[#allocation5 + $0x160] sm:$0xff]
    %v128 = vld [vmem:[#allocation5 + $0x168] sm:$0xff]
    %v129 = vld [vmem:[#allocation5 + $0x170] sm:$0xff]
    %v130 = vld [vmem:[#allocation5 + $0x178] sm:$0xff]
    %v131 = vld [vmem:[#allocation5 + $0x180] sm:$0xff]
    %v132 = vld [vmem:[#allocation5 + $0x188] sm:$0xff]
    %v133 = vld [vmem:[#allocation5 + $0x190] sm:$0xff]
    %v134 = vld [vmem:[#allocation5 + $0x198] sm:$0xff]
    %v135 = vld [vmem:[#allocation5 + $0x1a0] sm:$0xff]
    %v136 = vld [vmem:[#allocation5 + $0x1a8] sm:$0xff]
    %v137 = vld [vmem:[#allocation5 + $0x1b0] sm:$0xff]
    %v138 = vld [vmem:[#allocation5 + $0x1b8] sm:$0xff]
    %v139 = vld [vmem:[#allocation5 + $0x1c0] sm:$0xff]
    %v140 = vld [vmem:[#allocation5 + $0x1c8] sm:$0xff]
    %v141 = vld [vmem:[#allocation5 + $0x1d0] sm:$0xff]
    %v142 = vld [vmem:[#allocation5 + $0x1d8] sm:$0xff]
    %v143 = vld [vmem:[#allocation5 + $0x1e0] sm:$0xff]
    %v144 = vld [vmem:[#allocation5 + $0x1e8] sm:$0xff]
    %v145 = vld [vmem:[#allocation5 + $0x1f0] sm:$0xff]
    %v146 = vld [vmem:[#allocation5 + $0x1f8] sm:$0xff]
    %v147 = vld [vmem:[#allocation5 + $0x200] sm:$0xff]
    %v148 = vld [vmem:[#allocation5 + $0x208] sm:$0xff]
    %v149 = vld [vmem:[#allocation5 + $0x210] sm:$0xff]
    %v150 = vld [vmem:[#allocation5 + $0x218] sm:$0xff]
    %v151 = vld [vmem:[#allocation5 + $0x220] sm:$0xff]
    %v152 = vld [vmem:[#allocation5 + $0x228] sm:$0xff]
    %v153 = vld [vmem:[#allocation5 + $0x230] sm:$0xff]
    %v154 = vld [vmem:[#allocation5 + $0x238] sm:$0xff]
    %v155 = vld [vmem:[#allocation5 + $0x240] sm:$0xff]
    %v156 = vld [vmem:[#allocation5 + $0x248] sm:$0xff]
    %v157 = vld [vmem:[#allocation5 + $0x250] sm:$0xff]
    %v158 = vld [vmem:[#allocation5 + $0x258] sm:$0xff]
    %v159 = vld [vmem:[#allocation5 + $0x260] sm:$0x3f]
    %v160 = vld [vmem:[#allocation5 + $0x268] sm:$0x3f]
    %v161 = vld [vmem:[%s2] sm:$0x3]
    %v163 = vlaneseq
    %v164 = vshrl.u32 %v163, 7
    %v165 = vsub.s32 0, %v164
    %v166 = vrot.slane %v161, %v165
    %v167 = vlaneseq
    %v168 = vshrl.u32 %v167, 7
    %v169 = vsub.s32 1, %v168
    %v170 = vrot.slane %v161, %v169
    %vm173 = vcmask 441344
    %v175 = vsel %vm173, %v82, 0
    %vm177 = vcmask 1045504
    %v179 = vsel %vm177, %v159, 0
    %v182 = vsel %vm177, %v160, 0
    %184 = vmatprep.subr.mxu0 %v84
    %185 = vmatpush1.msra.mxu0 %v83
    %186 = vmatprep.subr.mxu0 %v86
    %187 = vmatpush1.msra.mxu0 %v85
    %188 = vmatprep.subr.mxu0 %v88
    %189 = vmatpush1.msra.mxu0 %v87
    %190 = vmatprep.subr.mxu0 %v90
    %191 = vmatpush1.msra.mxu0 %v89
    %192 = vmatprep.subr.mxu0 %v92
    %193 = vmatpush1.msra.mxu0 %v91
    %194 = vmatprep.subr.mxu0 %v94
    %195 = vmatpush1.msra.mxu0 %v93
    %196 = vmatprep.subr.mxu0 %v96
    %197 = vmatpush1.msra.mxu0 %v95
    %198 = vmatprep.subr.mxu0 %v98
    %199 = vmatpush1.msra.mxu0 %v97
    %200 = vmatprep.subr.mxu0 %v100
    %201 = vmatpush1.msra.mxu0 %v99
    %202 = vmatprep.subr.mxu0 %v102
    %203 = vmatpush1.msra.mxu0 %v101
    %204 = vmatprep.subr.mxu0 %v104
    %205 = vmatpush1.msra.mxu0 %v103
    %206 = vmatprep.subr.mxu0 %v106
    %207 = vmatpush1.msra.mxu0 %v105
    %208 = vmatprep.subr.mxu0 %v108
    %209 = vmatpush1.msra.mxu0 %v107
    %210 = vmatprep.subr.mxu0 %v110
    %211 = vmatpush1.msra.mxu0 %v109
    %212 = vmatprep.subr.mxu0 %v112
    %213 = vmatpush1.msra.mxu0 %v111
    %214 = vmatprep.subr.mxu0 %v114
    %215 = vmatpush1.msra.mxu0 %v113
    %216 = vmatprep.subr.mxu0 %v116
    %217 = vmatpush1.msra.mxu0 %v115
    %218 = vmatprep.subr.mxu0 %v118
    %219 = vmatpush1.msra.mxu0 %v117
    %220 = vmatprep.subr.mxu0 %v120
    %221 = vmatpush1.msra.mxu0 %v119
    %222 = vmatprep.subr.mxu0 %v122
    %223 = vmatpush1.msra.mxu0 %v121
    %224 = vmatprep.subr.mxu0 %v124
    %225 = vmatpush1.msra.mxu0 %v123
    %226 = vmatprep.subr.mxu0 %v126
    %227 = vmatpush1.msra.mxu0 %v125
    %228 = vmatprep.subr.mxu0 %v128
    %229 = vmatpush1.msra.mxu0 %v127
    %230 = vmatprep.subr.mxu0 %v130
    %231 = vmatpush1.msra.mxu0 %v129
    %232 = vmatprep.subr.mxu0 %v132
    %233 = vmatpush1.msra.mxu0 %v131
    %234 = vmatprep.subr.mxu0 %v134
    %235 = vmatpush1.msra.mxu0 %v133
    %236 = vmatprep.subr.mxu0 %v136
    %237 = vmatpush1.msra.mxu0 %v135
    %238 = vmatprep.subr.mxu0 %v138
    %239 = vmatpush1.msra.mxu0 %v137
    %240 = vmatprep.subr.mxu0 %v140
    %241 = vmatpush1.msra.mxu0 %v139
    %242 = vmatprep.subr.mxu0 %v142
    %243 = vmatpush1.msra.mxu0 %v141
    %244 = vmatprep.subr.mxu0 %v144
    %245 = vmatpush1.msra.mxu0 %v143
    %246 = vmatprep.subr.mxu0 %v146
    %247 = vmatpush1.msra.mxu0 %v145
    %248 = vmatprep.mubr.f32.mxu0 %v81
    %249 = vmatmul.mubr.f32.gmra.mrb[0].mxu0 %v80
    %v250 = vpop.f32.mrb[0].mxu0
    %v251 = vadd.f32 %v166, %v250
    %v252 = vpop.f32.mrb[0].mxu0
    %v253 = vadd.f32 %v170, %v252
    %254 = vdwg.mxu0
    %255 = vmatprep.subr.mxu0 %v148
    %256 = vmatpush1.msra.mxu0 %v147
    %257 = vmatprep.subr.mxu0 %v150
    %258 = vmatpush1.msra.mxu0 %v149
    %259 = vmatprep.subr.mxu0 %v152
    %260 = vmatpush1.msra.mxu0 %v151
    %261 = vmatprep.subr.mxu0 %v154
    %262 = vmatpush1.msra.mxu0 %v153
    %263 = vmatprep.subr.mxu0 %v156
    %264 = vmatpush1.msra.mxu0 %v155
    %265 = vmatprep.subr.mxu0 %v158
    %266 = vmatpush1.msra.mxu0 %v157
    %267 = vmatprep.subr.mxu0 %v182
    %268 = vmatpush1.msra.mxu0 %v179
    %269 = vmatprep.subr.mxu0 0.0
    %270 = vmatpush1.msra.mxu0 0.0
    %271 = vmatprep.subr.mxu0 0.0
    %272 = vmatpush1.msra.mxu0 0.0
    %273 = vmatprep.subr.mxu0 0.0
    %274 = vmatpush1.msra.mxu0 0.0
    %275 = vmatprep.subr.mxu0 0.0
    %276 = vmatpush1.msra.mxu0 0.0
    %277 = vmatprep.subr.mxu0 0.0
    %278 = vmatpush1.msra.mxu0 0.0
    %279 = vmatprep.subr.mxu0 0.0
    %280 = vmatpush1.msra.mxu0 0.0
    %281 = vmatprep.subr.mxu0 0.0
    %282 = vmatpush1.msra.mxu0 0.0
    %283 = vmatprep.subr.mxu0 0.0
    %284 = vmatpush1.msra.mxu0 0.0
    %285 = vmatprep.subr.mxu0 0.0
    %286 = vmatpush1.msra.mxu0 0.0
    %287 = vmatprep.subr.mxu0 0.0
    %288 = vmatpush1.msra.mxu0 0.0
    %289 = vmatprep.subr.mxu0 0.0
    %290 = vmatpush1.msra.mxu0 0.0
    %291 = vmatprep.subr.mxu0 0.0
    %292 = vmatpush1.msra.mxu0 0.0
    %293 = vmatprep.subr.mxu0 0.0
    %294 = vmatpush1.msra.mxu0 0.0
    %295 = vmatprep.subr.mxu0 0.0
    %296 = vmatpush1.msra.mxu0 0.0
    %297 = vmatprep.subr.mxu0 0.0
    %298 = vmatpush1.msra.mxu0 0.0
    %299 = vmatprep.subr.mxu0 0.0
    %300 = vmatpush1.msra.mxu0 0.0
    %301 = vmatprep.subr.mxu0 0.0
    %302 = vmatpush1.msra.mxu0 0.0
    %303 = vmatprep.subr.mxu0 0.0
    %304 = vmatpush1.msra.mxu0 0.0
    %305 = vmatprep.subr.mxu0 0.0
    %306 = vmatpush1.msra.mxu0 0.0
    %307 = vmatprep.subr.mxu0 0.0
    %308 = vmatpush1.msra.mxu0 0.0
    %309 = vmatprep.subr.mxu0 0.0
    %310 = vmatpush1.msra.mxu0 0.0
    %311 = vmatprep.subr.mxu0 0.0
    %312 = vmatpush1.msra.mxu0 0.0
    %313 = vmatprep.subr.mxu0 0.0
    %314 = vmatpush1.msra.mxu0 0.0
    %315 = vmatprep.subr.mxu0 0.0
    %316 = vmatpush1.msra.mxu0 0.0
    %317 = vmatprep.subr.mxu0 0.0
    %318 = vmatpush1.msra.mxu0 0.0
    %319 = vmatprep.mubr.f32.mxu0 0.0
    %320 = vmatmul.mubr.f32.gmra.mrb[0].mxu0 %v175
    %v321 = vpop.f32.mrb[0].mxu0
    %v322 = vadd.f32 %v251, %v321
    %v323 = vpop.f32.mrb[0].mxu0
    %v324 = vadd.f32 %v253, %v323
    %325 = vdwg.mxu0
    %v326 = vmul.f32 %v322, 0.01
    %v327 = vmul.f32 %v324, 0.01
    %v328 = vmax.f32 %v322, %v326
    %v329 = vmax.f32 %v324, %v327
    %v330 = vld [vmem:[#allocation7] sm:$0xff]
    %v331 = vld [vmem:[#allocation7 + $0x8] sm:$0xff]
    %v332 = vld [vmem:[#allocation7 + $0x10] sm:$0xff]
    %v333 = vld [vmem:[#allocation7 + $0x18] sm:$0xff]
    %v334 = vld [vmem:[#allocation7 + $0x20] sm:$0xff]
    %v335 = vld [vmem:[#allocation7 + $0x28] sm:$0xff]
    %v336 = vld [vmem:[#allocation7 + $0x30] sm:$0xff]
    %v337 = vld [vmem:[#allocation7 + $0x38] sm:$0xff]
    %v338 = vld [vmem:[#allocation7 + $0x40] sm:$0xff]
    %v339 = vld [vmem:[#allocation7 + $0x48] sm:$0xff]
    %v340 = vld [vmem:[#allocation7 + $0x50] sm:$0xff]
    %v341 = vld [vmem:[#allocation7 + $0x58] sm:$0xff]
    %v342 = vld [vmem:[#allocation7 + $0x60] sm:$0xff]
    %v343 = vld [vmem:[#allocation7 + $0x68] sm:$0xff]
    %v344 = vld [vmem:[#allocation7 + $0x70] sm:$0xff]
    %v345 = vld [vmem:[#allocation7 + $0x78] sm:$0xff]
    %v346 = vld [vmem:[#allocation7 + $0x80] sm:$0xff]
    %v347 = vld [vmem:[#allocation7 + $0x88] sm:$0xff]
    %v348 = vld [vmem:[#allocation7 + $0x90] sm:$0xff]
    %v349 = vld [vmem:[#allocation7 + $0x98] sm:$0xff]
    %v350 = vld [vmem:[#allocation7 + $0xa0] sm:$0xff]
    %v351 = vld [vmem:[#allocation7 + $0xa8] sm:$0xff]
    %v352 = vld [vmem:[#allocation7 + $0xb0] sm:$0xff]
    %v353 = vld [vmem:[#allocation7 + $0xb8] sm:$0xff]
    %v354 = vld [vmem:[#allocation7 + $0xc0] sm:$0xff]
    %v355 = vld [vmem:[#allocation7 + $0xc8] sm:$0xff]
    %v356 = vld [vmem:[#allocation7 + $0xd0] sm:$0xff]
    %v357 = vld [vmem:[#allocation7 + $0xd8] sm:$0xff]
    %v358 = vld [vmem:[#allocation7 + $0xe0] sm:$0xff]
    %v359 = vld [vmem:[#allocation7 + $0xe8] sm:$0xff]
    %v360 = vld [vmem:[#allocation7 + $0xf0] sm:$0xff]
    %v361 = vld [vmem:[#allocation7 + $0xf8] sm:$0xff]
    %v362 = vld [vmem:[%s4] sm:$0x1]
    %v364 = vlaneseq
    %v365 = vshrl.u32 %v364, 7
    %v366 = vsub.s32 0, %v365
    %v367 = vrot.slane %v362, %v366
    %369 = vmatprep.subr.mxu0 0.0
    %370 = vmatpush1.msra.mxu0 %v330
    %371 = vmatprep.subr.mxu0 0.0
    %372 = vmatpush1.msra.mxu0 %v331
    %373 = vmatprep.subr.mxu0 0.0
    %374 = vmatpush1.msra.mxu0 %v332
    %375 = vmatprep.subr.mxu0 0.0
    %376 = vmatpush1.msra.mxu0 %v333
    %377 = vmatprep.subr.mxu0 0.0
    %378 = vmatpush1.msra.mxu0 %v334
    %379 = vmatprep.subr.mxu0 0.0
    %380 = vmatpush1.msra.mxu0 %v335
    %381 = vmatprep.subr.mxu0 0.0
    %382 = vmatpush1.msra.mxu0 %v336
    %383 = vmatprep.subr.mxu0 0.0
    %384 = vmatpush1.msra.mxu0 %v337
    %385 = vmatprep.subr.mxu0 0.0
    %386 = vmatpush1.msra.mxu0 %v338
    %387 = vmatprep.subr.mxu0 0.0
    %388 = vmatpush1.msra.mxu0 %v339
    %389 = vmatprep.subr.mxu0 0.0
    %390 = vmatpush1.msra.mxu0 %v340
    %391 = vmatprep.subr.mxu0 0.0
    %392 = vmatpush1.msra.mxu0 %v341
    %393 = vmatprep.subr.mxu0 0.0
    %394 = vmatpush1.msra.mxu0 %v342
    %395 = vmatprep.subr.mxu0 0.0
    %396 = vmatpush1.msra.mxu0 %v343
    %397 = vmatprep.subr.mxu0 0.0
    %398 = vmatpush1.msra.mxu0 %v344
    %399 = vmatprep.subr.mxu0 0.0
    %400 = vmatpush1.msra.mxu0 %v345
    %401 = vmatprep.subr.mxu0 0.0
    %402 = vmatpush1.msra.mxu0 %v346
    %403 = vmatprep.subr.mxu0 0.0
    %404 = vmatpush1.msra.mxu0 %v347
    %405 = vmatprep.subr.mxu0 0.0
    %406 = vmatpush1.msra.mxu0 %v348
    %407 = vmatprep.subr.mxu0 0.0
    %408 = vmatpush1.msra.mxu0 %v349
    %409 = vmatprep.subr.mxu0 0.0
    %410 = vmatpush1.msra.mxu0 %v350
    %411 = vmatprep.subr.mxu0 0.0
    %412 = vmatpush1.msra.mxu0 %v351
    %413 = vmatprep.subr.mxu0 0.0
    %414 = vmatpush1.msra.mxu0 %v352
    %415 = vmatprep.subr.mxu0 0.0
    %416 = vmatpush1.msra.mxu0 %v353
    %417 = vmatprep.subr.mxu0 0.0
    %418 = vmatpush1.msra.mxu0 %v354
    %419 = vmatprep.subr.mxu0 0.0
    %420 = vmatpush1.msra.mxu0 %v355
    %421 = vmatprep.subr.mxu0 0.0
    %422 = vmatpush1.msra.mxu0 %v356
    %423 = vmatprep.subr.mxu0 0.0
    %424 = vmatpush1.msra.mxu0 %v357
    %425 = vmatprep.subr.mxu0 0.0
    %426 = vmatpush1.msra.mxu0 %v358
    %427 = vmatprep.subr.mxu0 0.0
    %428 = vmatpush1.msra.mxu0 %v359
    %429 = vmatprep.subr.mxu0 0.0
    %430 = vmatpush1.msra.mxu0 %v360
    %431 = vmatprep.subr.mxu0 0.0
    %432 = vmatpush1.msra.mxu0 %v361
    %433 = vmatprep.mubr.f32.mxu0 %v329
    %434 = vmatmul.mubr.f32.gmra.mrb[0].mxu0 %v328
    %v435 = vpop.f32.mrb[0].mxu0
    %v436 = vadd.f32 %v367, %v435
    %v437 = vpop.f32.mrb[0].mxu0
    %438 = vdwg.mxu0
    %v439 = vmul.f32 %v436, 0.01
    %v440 = vmax.f32 %v436, %v439
    %v441 = vld [vmem:[#allocation8] sm:$0xff]
    %v442 = vld [vmem:[#allocation8 + $0x8] sm:$0xff]
    %v443 = vld [vmem:[#allocation8 + $0x10] sm:$0xff]
    %v444 = vld [vmem:[#allocation8 + $0x18] sm:$0xff]
    %v445 = vld [vmem:[#allocation8 + $0x20] sm:$0xff]
    %v446 = vld [vmem:[#allocation8 + $0x28] sm:$0xff]
    %v447 = vld [vmem:[#allocation8 + $0x30] sm:$0xff]
    %v448 = vld [vmem:[#allocation8 + $0x38] sm:$0xff]
    %v449 = vld [vmem:[#allocation8 + $0x40] sm:$0xff]
    %v450 = vld [vmem:[#allocation8 + $0x48] sm:$0xff]
    %v451 = vld [vmem:[#allocation8 + $0x50] sm:$0xff]
    %v452 = vld [vmem:[#allocation8 + $0x58] sm:$0xff]
    %v453 = vld [vmem:[#allocation8 + $0x60] sm:$0xff]
    %v454 = vld [vmem:[#allocation8 + $0x68] sm:$0xff]
    %v455 = vld [vmem:[#allocation8 + $0x70] sm:$0xff]
    %v456 = vld [vmem:[#allocation8 + $0x78] sm:$0xff]
    %v457 = vld [vmem:[%s6] sm:$0x1]
    %v459 = vlaneseq
    %v460 = vshrl.u32 %v459, 7
    %v461 = vsub.s32 0, %v460
    %v462 = vrot.slane %v457, %v461
    %464 = vmatprep.subr.mxu0 0.0
    %465 = vmatpush1.msra.mxu0 %v441
    %466 = vmatprep.subr.mxu0 0.0
    %467 = vmatpush1.msra.mxu0 %v442
    %468 = vmatprep.subr.mxu0 0.0
    %469 = vmatpush1.msra.mxu0 %v443
    %470 = vmatprep.subr.mxu0 0.0
    %471 = vmatpush1.msra.mxu0 %v444
    %472 = vmatprep.subr.mxu0 0.0
    %473 = vmatpush1.msra.mxu0 %v445
    %474 = vmatprep.subr.mxu0 0.0
    %475 = vmatpush1.msra.mxu0 %v446
    %476 = vmatprep.subr.mxu0 0.0
    %477 = vmatpush1.msra.mxu0 %v447
    %478 = vmatprep.subr.mxu0 0.0
    %479 = vmatpush1.msra.mxu0 %v448
    %480 = vmatprep.subr.mxu0 0.0
    %481 = vmatpush1.msra.mxu0 %v449
    %482 = vmatprep.subr.mxu0 0.0
    %483 = vmatpush1.msra.mxu0 %v450
    %484 = vmatprep.subr.mxu0 0.0
    %485 = vmatpush1.msra.mxu0 %v451
    %486 = vmatprep.subr.mxu0 0.0
    %487 = vmatpush1.msra.mxu0 %v452
    %488 = vmatprep.subr.mxu0 0.0
    %489 = vmatpush1.msra.mxu0 %v453
    %490 = vmatprep.subr.mxu0 0.0
    %491 = vmatpush1.msra.mxu0 %v454
    %492 = vmatprep.subr.mxu0 0.0
    %493 = vmatpush1.msra.mxu0 %v455
    %494 = vmatprep.subr.mxu0 0.0
    %495 = vmatpush1.msra.mxu0 %v456
    %496 = vmatprep.subr.mxu0 0.0
    %497 = vmatpush1.msra.mxu0 0.0
    %498 = vmatprep.subr.mxu0 0.0
    %499 = vmatpush1.msra.mxu0 0.0
    %500 = vmatprep.subr.mxu0 0.0
    %501 = vmatpush1.msra.mxu0 0.0
    %502 = vmatprep.subr.mxu0 0.0
    %503 = vmatpush1.msra.mxu0 0.0
    %504 = vmatprep.subr.mxu0 0.0
    %505 = vmatpush1.msra.mxu0 0.0
    %506 = vmatprep.subr.mxu0 0.0
    %507 = vmatpush1.msra.mxu0 0.0
    %508 = vmatprep.subr.mxu0 0.0
    %509 = vmatpush1.msra.mxu0 0.0
    %510 = vmatprep.subr.mxu0 0.0
    %511 = vmatpush1.msra.mxu0 0.0
    %512 = vmatprep.subr.mxu0 0.0
    %513 = vmatpush1.msra.mxu0 0.0
    %514 = vmatprep.subr.mxu0 0.0
    %515 = vmatpush1.msra.mxu0 0.0
    %516 = vmatprep.subr.mxu0 0.0
    %517 = vmatpush1.msra.mxu0 0.0
    %518 = vmatprep.subr.mxu0 0.0
    %519 = vmatpush1.msra.mxu0 0.0
    %520 = vmatprep.subr.mxu0 0.0
    %521 = vmatpush1.msra.mxu0 0.0
    %522 = vmatprep.subr.mxu0 0.0
    %523 = vmatpush1.msra.mxu0 0.0
    %524 = vmatprep.subr.mxu0 0.0
    %525 = vmatpush1.msra.mxu0 0.0
    %526 = vmatprep.subr.mxu0 0.0
    %527 = vmatpush1.msra.mxu0 0.0
    %528 = vmatprep.mubr.f32.mxu0 0.0
    %529 = vmatmul.mubr.f32.gmra.mrb[0].mxu0 %v440
    %v530 = vpop.f32.mrb[0].mxu0
    %v531 = vadd.f32 %v462, %v530
    %v532 = vpop.f32.mrb[0].mxu0
    %533 = vdwg.mxu0
    %v534 = vmul.f32 %v531, 0.01
    %v535 = vmax.f32 %v531, %v534
    %536 = vst [vmem:[#allocation10] sm:$0xff] %v535
    // Predicated region
    $region46: #{tpu_custom_call.1} parent=1 // pred_check
      _
    $region47: #{tpu_custom_call.1} parent=1 // pred_check_branch
      %538 = sbr.rel (0) target = $region49
    $region48: #{tpu_custom_call.1} parent=1 // pred_region
      %s540 = ssub.s32 128, 128
      %541 = vsyncadd [#allocation4], %s540
      %s543 = sshll.u32 [#allocation10], 4
      %s544 = int_to_ptr.vmem [resolvable:$true] %s543
      %546 = dma.vmem_to_hbm [thread:$0]  %s544, 128, %s7, [#allocation4]
    $region49: #{tpu_custom_call.1} parent=1 // pred_fallthru
      _
    // Predicated region
    $region50: #{tpu_custom_call.1} parent=1 // pred_check
      _
    $region51: #{tpu_custom_call.1} parent=1 // pred_check_branch
      %548 = sbr.rel (0) target = $region53
    $region52: #{tpu_custom_call.1} parent=1 // pred_region
      %549 = dma.done [#allocation4], 128
    $region53: #{tpu_custom_call.1} parent=1 // pred_fallthru
      _
    %550 = vsyncpa [#allocation3], 1
    %551 = vsyncpa [#allocation6], 1
    %552 = vsyncpa [#allocation9], 1
    %553 = vsyncpa [#allocation4], 1

</llo_original>
